<compile_context>
chip_gen: v7x
topology: tpu7x:2x2x1
jax: 0.10.0
libtpu: 0.0.40
codegen_flags: <defaults>
</compile_context>

<pallas_src>
import jax
import jax.numpy as jnp
from jax import lax
from jax.experimental import pallas as pl
from jax.experimental.pallas import tpu as pltpu


def _sa_kernel(gamma_ref,     # SMEM (1,) f32
               q_ref,         # (1, TQ, C) bf16 : query projection rows
               k_ref,         # (1, C, N)  bf16 : key projection (resident per batch)
               v_ref,         # (1, C, N)  bf16 : value projection (resident per batch)
               xres_ref,      # (1, C, TQ) f32  : residual columns of x
               o_ref):        # (1, C, TQ) f32
    q = q_ref[0]              # (TQ, C)
    k = k_ref[0]              # (C, N)
    v = v_ref[0]              # (C, N)
    x_res = xres_ref[0]       # (C, TQ)

    # energy[n, m] = <q_n, k_m>  : (TQ, C) @ (C, N) -> (TQ, N), bf16 MXU, f32 acc.
    energy = jnp.dot(q, k, preferred_element_type=jnp.float32)

    # Numerically stable softmax NUMERATOR only (normalization deferred).
    m_row = jnp.max(energy, axis=-1, keepdims=True)
    p = jnp.exp(energy - m_row)                    # (TQ, N) f32, values in (0, 1]
    pb = p.astype(jnp.bfloat16)

    # Unnormalized PV: out_un[c, n] = sum_m v[c, m] * p[n, m]
    # (C, N) x (TQ, N) contracted over N -> (C, TQ); transpose-rhs MXU form, lane-dense.
    out_un = lax.dot_general(v, pb, (((1,), (1,)), ((), ())),
                             preferred_element_type=jnp.float32)

    # Row softmax denominators as a lane-dense (1, TQ) row via a ones-row matmul
    # against the same bf16 slab (rounding cancels in the numerator/denominator ratio).
    ones_row = jnp.ones((1, pb.shape[-1]), jnp.bfloat16)
    denom = lax.dot_general(ones_row, pb, (((1,), (1,)), ((), ())),
                            preferred_element_type=jnp.float32)   # (1, TQ)

    # Fold gamma into the per-row softmax scale; reciprocal runs on the free EUP slot.
    scale = gamma_ref[0] * pl.reciprocal(denom, approx=True)       # (1, TQ)
    o_ref[0] = (out_un * scale + x_res).astype(o_ref.dtype)


def sa_module_forward(x_nchw, wq, bq, wk, bk, wv, bv, gamma, *, tq=None):
    """x_nchw: (B, C, H, W) float32. wq/wk/wv: (C, C) squeezed 1x1-conv weights
    (y = W @ x + b per position). bq/bk/bv: (C,). gamma: scalar."""
    B, C, H, W = x_nchw.shape
    N = H * W

    if tq is None:
        if N % 128 != 0:
            tq = N                                    # small / odd spatial: single row tile
        elif N % 256 == 0 and N <= 8192:
            tq = 256                                  # bigger tile amortizes per-step overhead
        else:
            tq = 128
    assert N % tq == 0, "query tile must divide H*W"
    n_row_tiles = N // tq

    # Lane-dense layout: zero-copy reshape of NCHW.
    x_cn = x_nchw.reshape(B, C, N).astype(jnp.float32)

    # 1x1 convs == per-position channel matmuls; do each ONCE per batch here
    # (batched XLA matmul) instead of once per query-row tile inside the kernel.
    # Cast to bf16: MXU operands + halved HBM/VMEM traffic for the resident blocks.
    q_nc = (jnp.einsum('bcn,oc->bno', x_cn, wq) + bq[None, None, :]).astype(jnp.bfloat16)
    k_cn = (jnp.einsum('oc,bcn->bon', wk, x_cn) + bk[None, :, None]).astype(jnp.bfloat16)
    v_cn = (jnp.einsum('oc,bcn->bon', wv, x_cn) + bv[None, :, None]).astype(jnp.bfloat16)

    gamma_arr = jnp.asarray(gamma, jnp.float32).reshape(1)

    # VMEM budget from the actual tile math (double-buffered streams + resident
    # K/V blocks + in-flight (TQ, N) slabs), capped v7x-safe.
    est = (2 * 2 * (C * N * 2)            # K, V resident blocks (2-buffered alloc), bf16
           + 2 * (tq * C * 2)             # Q row tiles, bf16
           + 2 * 2 * (C * tq * 4)         # x_res input + output tiles, f32
           + 3 * (tq * N * 4))            # energy / p / pb slabs (upper bound)
    vmem_limit = int(min(max(2 * est, 32 * 1024 * 1024), 56 * 1024 * 1024))

    out_cn = pl.pallas_call(
        _sa_kernel,
        out_shape=jax.ShapeDtypeStruct((B, C, N), jnp.float32),
        grid_spec=pltpu.PrefetchScalarGridSpec(
            num_scalar_prefetch=0,
            grid=(B, n_row_tiles),
            in_specs=[
                pl.BlockSpec((1,), lambda b, i: (0,),
                             memory_space=pltpu.SMEM),                 # gamma
                pl.BlockSpec((1, tq, C), lambda b, i: (b, i, 0)),      # Q rows
                pl.BlockSpec((1, C, N), lambda b, i: (b, 0, 0)),       # K (resident per batch)
                pl.BlockSpec((1, C, N), lambda b, i: (b, 0, 0)),       # V (resident per batch)
                pl.BlockSpec((1, C, tq), lambda b, i: (b, 0, i)),      # residual x columns
            ],
            out_specs=pl.BlockSpec((1, C, tq), lambda b, i: (b, 0, i)),
        ),
        compiler_params=pltpu.CompilerParams(
            dimension_semantics=("parallel", "parallel"),
            vmem_limit_bytes=vmem_limit),
    )(gamma_arr, q_nc, k_cn, v_cn, x_cn)

    # (B, C, N) -> (B, C, H, W): pure reshape, no transpose.
    return out_cn.reshape(B, C, H, W)


def _reference(x_nchw, wq, bq, wk, bk, wv, bv, gamma):
    """Pure-JAX f32 reference mirroring the PyTorch forward."""
    B, C, H, W = x_nchw.shape
    N = H * W

    def conv1x1(x, w, b):  # (B,C,H,W), w (Co,Ci), b (Co,)
        return jnp.einsum('bchw,oc->bohw', x, w) + b[None, :, None, None]

    pq = conv1x1(x_nchw, wq, bq).reshape(B, C, N).transpose(0, 2, 1)  # (B,N,C)
    pk = conv1x1(x_nchw, wk, bk).reshape(B, C, N)                     # (B,C,N)
    energy = jnp.einsum('bnc,bcm->bnm', pq, pk)
    attn = jax.nn.softmax(energy, axis=-1)
    pv = conv1x1(x_nchw, wv, bv).reshape(B, C, N)                     # (B,C,N)
    out = jnp.einsum('bcm,bnm->bcn', pv, attn).reshape(B, C, H, W)
    return gamma * out + x_nchw


if __name__ == "__main__":
    B, C, H, W = 2, 4, 16, 16
    key = jax.random.PRNGKey(0)
    kx, kq, kkq, kv, kbq, kbk, kbv = jax.random.split(key, 7)

    x = jax.random.normal(kx, (B, C, H, W), jnp.float32)
    # Conv2d(in_dim, in_dim, kernel_size=1) weights -> (C, C), biases -> (C,)
    wq = jax.random.normal(kq, (C, C), jnp.float32) * 0.1
    wk = jax.random.normal(kkq, (C, C), jnp.float32) * 0.1
    wv = jax.random.normal(kv, (C, C), jnp.float32) * 0.1
    bq = jax.random.normal(kbq, (C,), jnp.float32) * 0.1
    bk = jax.random.normal(kbk, (C,), jnp.float32) * 0.1
    bv = jax.random.normal(kbv, (C,), jnp.float32) * 0.1
    # Module inits gamma to 0 (output == x); use a nonzero value so the
    # attention path is actually exercised numerically.
    gamma = jnp.float32(0.5)

    y = sa_module_forward(x, wq, bq, wk, bk, wv, bv, gamma)
    y = jax.block_until_ready(y)

    y_ref = _reference(x, wq, bq, wk, bk, wv, bv, gamma)
    assert y.shape == (B, C, H, W)
    # Tolerance accounts for bf16 MXU operands (Q/K/V and the probability slab,
    # rel. err ~2^-8) and the EUP approximate reciprocal in the deferred softmax
    # normalization; all accumulation and the residual path stay f32.
    assert jnp.allclose(y, y_ref, atol=2e-2, rtol=2e-2), "mismatch vs reference"

    print("KERNEL_OK")
</pallas_src>

<mosaic_0001>
module attributes {stable_mosaic.version = 11 : i64} {
  func.func @_sa_kernel(%arg0: i32, %arg1: i32, %arg2: memref<1xf32, #tpu.memory_space<smem>>, %arg3: memref<1x256x4xbf16, #tpu.memory_space<vmem>>, %arg4: memref<1x4x256xbf16, #tpu.memory_space<vmem>>, %arg5: memref<1x4x256xbf16, #tpu.memory_space<vmem>>, %arg6: memref<1x4x256xf32, #tpu.memory_space<vmem>>, %arg7: memref<1x4x256xf32, #tpu.memory_space<vmem>>) attributes {dimension_semantics = [#tpu.dimension_semantics<parallel>, #tpu.dimension_semantics<parallel>], iteration_bounds = array<i64: 2, 1>, scalar_prefetch = 0 : i64, scratch_operands = 0 : i64, tpu.core_type = #tpu.core_type<tc>, window_params = [{transform_indices = @transform_0, window_bounds = array<i64: 1>}, {transform_indices = @transform_1, window_bounds = array<i64: 1, 256, 4>}, {transform_indices = @transform_2, window_bounds = array<i64: 1, 4, 256>}, {transform_indices = @transform_3, window_bounds = array<i64: 1, 4, 256>}, {transform_indices = @transform_4, window_bounds = array<i64: 1, 4, 256>}, {transform_indices = @transform_5, window_bounds = array<i64: 1, 4, 256>}]} {
    %c0 = arith.constant 0 : index
    %c0_0 = arith.constant 0 : index
    %c0_1 = arith.constant 0 : index
    %0 = vector.load %arg3[%c0, %c0_0, %c0_1] : memref<1x256x4xbf16, #tpu.memory_space<vmem>>, vector<1x256x4xbf16>
    %1 = vector.shape_cast %0 : vector<1x256x4xbf16> to vector<256x4xbf16>
    %c0_2 = arith.constant 0 : index
    %c0_3 = arith.constant 0 : index
    %c0_4 = arith.constant 0 : index
    %2 = vector.load %arg4[%c0_2, %c0_3, %c0_4] : memref<1x4x256xbf16, #tpu.memory_space<vmem>>, vector<1x4x256xbf16>
    %3 = vector.shape_cast %2 : vector<1x4x256xbf16> to vector<4x256xbf16>
    %c0_5 = arith.constant 0 : index
    %c0_6 = arith.constant 0 : index
    %c0_7 = arith.constant 0 : index
    %4 = vector.load %arg5[%c0_5, %c0_6, %c0_7] : memref<1x4x256xbf16, #tpu.memory_space<vmem>>, vector<1x4x256xbf16>
    %5 = vector.shape_cast %4 : vector<1x4x256xbf16> to vector<4x256xbf16>
    %c0_8 = arith.constant 0 : index
    %c0_9 = arith.constant 0 : index
    %c0_10 = arith.constant 0 : index
    %6 = vector.load %arg6[%c0_8, %c0_9, %c0_10] : memref<1x4x256xf32, #tpu.memory_space<vmem>>, vector<1x4x256xf32>
    %7 = vector.shape_cast %6 : vector<1x4x256xf32> to vector<4x256xf32>
    %cst = arith.constant dense<0.000000e+00> : vector<256x256xf32>
    %8 = tpu.matmul %1, %3, %cst {dimension_numbers = #tpu.dot_dimension_numbers<[1], [0], [0], [1], [0, 0, 1, 1], [], []>} : vector<256x4xbf16>, vector<4x256xbf16>, vector<256x256xf32> -> vector<256x256xf32>
    %cst_11 = arith.constant dense<0xFF800000> : vector<256xf32>
    %9 = vector.multi_reduction <maximumf>, %8, %cst_11 [1] : vector<256x256xf32> to vector<256xf32>
    %10 = vector.shape_cast %9 : vector<256xf32> to vector<256x1xf32>
    %11 = vector.broadcast %10 : vector<256x1xf32> to vector<256x256xf32>
    %12 = arith.subf %8, %11 : vector<256x256xf32>
    %13 = math.exp %12 : vector<256x256xf32>
    %14 = arith.truncf %13 : vector<256x256xf32> to vector<256x256xbf16>
    %cst_12 = arith.constant dense<0.000000e+00> : vector<4x256xf32>
    %15 = tpu.matmul %5, %14, %cst_12 {dimension_numbers = #tpu.dot_dimension_numbers<[1], [1], [0], [0], [0, 0, 1, 0], [], []>} : vector<4x256xbf16>, vector<256x256xbf16>, vector<4x256xf32> -> vector<4x256xf32>
    %cst_13 = arith.constant 1.000000e+00 : bf16
    %16 = vector.broadcast %cst_13 : bf16 to vector<1x256xbf16>
    %cst_14 = arith.constant dense<0.000000e+00> : vector<1x256xf32>
    %17 = tpu.matmul %16, %14, %cst_14 {dimension_numbers = #tpu.dot_dimension_numbers<[1], [1], [0], [0], [0, 0, 1, 0], [], []>} : vector<1x256xbf16>, vector<256x256xbf16>, vector<1x256xf32> -> vector<1x256xf32>
    %c0_15 = arith.constant 0 : index
    %18 = memref.load %arg2[%c0_15] : memref<1xf32, #tpu.memory_space<smem>>
    %19 = tpu.reciprocal %17 {approx = true} : vector<1x256xf32> -> vector<1x256xf32>
    %20 = vector.broadcast %18 : f32 to vector<1x256xf32>
    %21 = arith.mulf %20, %19 : vector<1x256xf32>
    %22 = vector.broadcast %21 : vector<1x256xf32> to vector<4x256xf32>
    %23 = arith.mulf %15, %22 : vector<4x256xf32>
    %24 = arith.addf %23, %7 : vector<4x256xf32>
    %c0_16 = arith.constant 0 : index
    %c0_17 = arith.constant 0 : index
    %c0_18 = arith.constant 0 : index
    %25 = vector.load %arg7[%c0_16, %c0_17, %c0_18] : memref<1x4x256xf32, #tpu.memory_space<vmem>>, vector<1x4x256xf32>
    %26 = vector.shape_cast %25 : vector<1x4x256xf32> to vector<4x256xf32>
    %27 = vector.shape_cast %24 : vector<4x256xf32> to vector<1x4x256xf32>
    tpu.vector_store %arg7[%c0_16, %c0_17, %c0_18], %27 {strides = array<i32>} : memref<1x4x256xf32, #tpu.memory_space<vmem>>, vector<1x4x256xf32>,
    return
  }
  func.func @transform_0(%arg0: i32, %arg1: i32) -> i32 {
    %c0_i32 = arith.constant 0 : i32
    %c0_i32_0 = arith.constant 0 : i32
    return %c0_i32 : i32
  }
  func.func @transform_1(%arg0: i32, %arg1: i32) -> (i32, i32, i32) {
    %c0_i32 = arith.constant 0 : i32
    %c0_i32_0 = arith.constant 0 : i32
    return %arg0, %arg1, %c0_i32 : i32, i32, i32
  }
  func.func @transform_2(%arg0: i32, %arg1: i32) -> (i32, i32, i32) {
    %c0_i32 = arith.constant 0 : i32
    %c0_i32_0 = arith.constant 0 : i32
    %c0_i32_1 = arith.constant 0 : i32
    return %arg0, %c0_i32, %c0_i32_0 : i32, i32, i32
  }
  func.func @transform_3(%arg0: i32, %arg1: i32) -> (i32, i32, i32) {
    %c0_i32 = arith.constant 0 : i32
    %c0_i32_0 = arith.constant 0 : i32
    %c0_i32_1 = arith.constant 0 : i32
    return %arg0, %c0_i32, %c0_i32_0 : i32, i32, i32
  }
  func.func @transform_4(%arg0: i32, %arg1: i32) -> (i32, i32, i32) {
    %c0_i32 = arith.constant 0 : i32
    %c0_i32_0 = arith.constant 0 : i32
    return %arg0, %c0_i32, %arg1 : i32, i32, i32
  }
  func.func @transform_5(%arg0: i32, %arg1: i32) -> (i32, i32, i32) {
    %c0_i32 = arith.constant 0 : i32
    %c0_i32_0 = arith.constant 0 : i32
    return %arg0, %c0_i32, %arg1 : i32, i32, i32
  }
}

</mosaic_0001>

<llo_original>
// kernel: tpu_custom_call.1
$region0: #{tpu_custom_call.1}
  #allocation0 [shape = 'u32[]', space=smem, size = 0x4, offset = 0x4, fixed_abs, tag = 'smem constant byte address 0x4 - core index']
  #allocation1 [shape = 'u32[144,128]{1,0:T(1,128)}', space=vmem, size = 0x12000, scoped, tag = 'internal scratch']
  #allocation2 [shape = 'f32[1]{0:T(128)S(6)}', space=smem, size = 0x200, scoped, tag = 'scoped memory for tpu_custom_call.1']
  %s0 = inlined_call_operand.<no memory space> [shape: f32[1], index: 0, kind: input, shape index: {}]
  %s1 = inlined_call_operand.vmem [shape: bf16[2,256,4], index: 1, kind: input, shape index: {}]
  %s2 = inlined_call_operand.vmem [shape: bf16[2,4,256], index: 2, kind: input, shape index: {}]
  %s3 = inlined_call_operand.vmem [shape: bf16[2,4,256], index: 3, kind: input, shape index: {}]
  %s4 = inlined_call_operand.vmem [shape: f32[2,4,256], index: 4, kind: input, shape index: {}]
  %s5 = inlined_call_operand.hbm [shape: f32[2,4,256], index: 5, kind: output, shape index: {}]
  %s6 = sld [smem:[#allocation0]]
  $region53: #{tpu_custom_call.1} parent=0
    _
  %s8 = ssub.s32 1, %s6
  %s9 = scalar_select 0, %s8, %s6
  %10 = sst [smem:[#allocation2]] %s0
  $region1: #{tpu_custom_call.1} parent=0
    #allocation3 [shape = 'u8[8192]{0}', space=vmem, size = 0x2000, scoped, tag = 'output window, operand 0']
    #allocation4 [shape = 's32[2]{0}', space=sflag, size = 0x8, scoped, tag = 'scoped memory for tpu_custom_call.1']
    %11 = vsyncpa [#allocation4], 0
    %s12 = scalar_lea.sflag [#allocation4], 1
    %13 = vsyncpa %s12, 0
    loop: start=0, step=1, limit=4
    $region2: #{tpu_custom_call.1} parent=1 // loop_pre_header
      _
    $region3: #{tpu_custom_call.1} parent=1 // loop_header
      %s15 = sphi 0, %s19
      %p16 = scmp.ge.s32.totalorder %s15, 4
      %s22 = sphi 0, %s34
      %s23 = sphi 0, %s30
      %s24 = sphi 0, %s22
      %s25 = sphi 0, %s23
      %s26 = sphi 0, %s24
      %s27 = sphi 0, %s25
      %s35 = sphi 0, %s35
      %s37 = sphi 0, %s35
      %s38 = sphi 0, %s37
      %s52 = sphi 0, %s38
      %s60 = sphi 0, %s62
      %s63 = sphi 0, %s60
      %s64 = sphi 0, %s63
      %s80 = sphi 0, %s64
      %s86 = sphi 0, %s88
      %s89 = sphi 0, %s86
      %s90 = sphi 0, %s89
      %s106 = sphi 0, %s90
      %s112 = sphi 0, %s114
      %s115 = sphi 0, %s112
      %s116 = sphi 0, %s115
      %s132 = sphi 0, %s116
      %s140 = sphi 0, %s142
      %s143 = sphi 0, %s140
      %s144 = sphi 0, %s143
      %s160 = sphi 0, %s144
      %s168 = sphi 0, %s170
      %s171 = sphi 0, %s168
      %s172 = sphi 0, %s171
      %s188 = sphi 0, %s172
    $region4: #{tpu_custom_call.1} parent=1 // loop_header_branch
      %18 = sbr.rel (%p16) target = $region8
    $region5: #{tpu_custom_call.1} parent=1 // loop_body
      %s20 = ssub.s32 %s15, 1
      %s21 = ssub.s32 %s15, 2
      %s28 = sadd.s32 1, %s23
      %p29 = scmp.ge.s32.totalorder %s28, 1
      %s30 = scalar_select %p29, 0, %s28
      %s31 = sadd.s32 1, %s22
      %s32 = scalar_select %p29, %s31, %s22
      %p33 = scmp.ge.s32.totalorder %s32, 2
      %s34 = scalar_select %p33, 0, %s32
      %s36 = sadd.s32 %s35, 1
      %p39 = scmp.eq.s32.totalorder %s15, 1
      %p40 = scmp.ne.s32.totalorder %s35, %s37
      %p41 = scmp.eq.s32.totalorder %s15, 0
      %p42 = por %p40, %p41
      %p43 = scmp.ne.s32.totalorder %s35, %s37
      %p44 = scmp.eq.s32.totalorder %s20, 1
      %p45 = por %p43, %p44
      %p46 = scmp.ne.s32.totalorder %s37, %s38
      %p47 = scmp.eq.s32.totalorder %s20, 0
      %p48 = por %p46, %p47
      %p49 = scmp.ne.s32.totalorder %s37, %s38
      %p50 = scmp.eq.s32.totalorder %s21, 1
      %p51 = por %p49, %p50
      %p53 = scmp.ne.s32.totalorder %s38, %s52
      %p54 = scmp.eq.s32.totalorder %s21, 0
      %p55 = por %p53, %p54
      %s56 = ssub.s32 %s22, %s34
      %s57 = ssub.s32 %s23, %s30
      %s58 = sor.u32 %s56, %s57
      %p59 = scmp.eq.s32.totalorder %s58, 0
      %s61 = sadd.s32 %s60, 1
      %s62 = scalar_select %p59, %s60, %s61
      %p65 = pneg %p59
      %p66 = scmp.eq.s32.totalorder %s15, 1
      %p67 = por %p65, %p66
      %p68 = scmp.ne.s32.totalorder %s60, %s63
      %p69 = scmp.eq.s32.totalorder %s15, 0
      %p70 = por %p68, %p69
      %p71 = scmp.ne.s32.totalorder %s60, %s63
      %p72 = scmp.eq.s32.totalorder %s20, 1
      %p73 = por %p71, %p72
      %p74 = scmp.ne.s32.totalorder %s63, %s64
      %p75 = scmp.eq.s32.totalorder %s20, 0
      %p76 = por %p74, %p75
      %p77 = scmp.ne.s32.totalorder %s63, %s64
      %p78 = scmp.eq.s32.totalorder %s21, 1
      %p79 = por %p77, %p78
      %p81 = scmp.ne.s32.totalorder %s64, %s80
      %p82 = scmp.eq.s32.totalorder %s21, 0
      %p83 = por %p81, %p82
      %s84 = ssub.s32 %s22, %s34
      %p85 = scmp.eq.s32.totalorder %s84, 0
      %s87 = sadd.s32 %s86, 1
      %s88 = scalar_select %p85, %s86, %s87
      %p91 = pneg %p85
      %p92 = scmp.eq.s32.totalorder %s15, 1
      %p93 = por %p91, %p92
      %p94 = scmp.ne.s32.totalorder %s86, %s89
      %p95 = scmp.eq.s32.totalorder %s15, 0
      %p96 = por %p94, %p95
      %p97 = scmp.ne.s32.totalorder %s86, %s89
      %p98 = scmp.eq.s32.totalorder %s20, 1
      %p99 = por %p97, %p98
      %p100 = scmp.ne.s32.totalorder %s89, %s90
      %p101 = scmp.eq.s32.totalorder %s20, 0
      %p102 = por %p100, %p101
      %p103 = scmp.ne.s32.totalorder %s89, %s90
      %p104 = scmp.eq.s32.totalorder %s21, 1
      %p105 = por %p103, %p104
      %p107 = scmp.ne.s32.totalorder %s90, %s106
      %p108 = scmp.eq.s32.totalorder %s21, 0
      %p109 = por %p107, %p108
      %s110 = ssub.s32 %s22, %s34
      %p111 = scmp.eq.s32.totalorder %s110, 0
      %s113 = sadd.s32 %s112, 1
      %s114 = scalar_select %p111, %s112, %s113
      %p117 = pneg %p111
      %p118 = scmp.eq.s32.totalorder %s15, 1
      %p119 = por %p117, %p118
      %p120 = scmp.ne.s32.totalorder %s112, %s115
      %p121 = scmp.eq.s32.totalorder %s15, 0
      %p122 = por %p120, %p121
      %p123 = scmp.ne.s32.totalorder %s112, %s115
      %p124 = scmp.eq.s32.totalorder %s20, 1
      %p125 = por %p123, %p124
      %p126 = scmp.ne.s32.totalorder %s115, %s116
      %p127 = scmp.eq.s32.totalorder %s20, 0
      %p128 = por %p126, %p127
      %p129 = scmp.ne.s32.totalorder %s115, %s116
      %p130 = scmp.eq.s32.totalorder %s21, 1
      %p131 = por %p129, %p130
      %p133 = scmp.ne.s32.totalorder %s116, %s132
      %p134 = scmp.eq.s32.totalorder %s21, 0
      %p135 = por %p133, %p134
      %s136 = ssub.s32 %s22, %s34
      %s137 = ssub.s32 %s23, %s30
      %s138 = sor.u32 %s136, %s137
      %p139 = scmp.eq.s32.totalorder %s138, 0
      %s141 = sadd.s32 %s140, 1
      %s142 = scalar_select %p139, %s140, %s141
      %p145 = pneg %p139
      %p146 = scmp.eq.s32.totalorder %s15, 1
      %p147 = por %p145, %p146
      %p148 = scmp.ne.s32.totalorder %s140, %s143
      %p149 = scmp.eq.s32.totalorder %s15, 0
      %p150 = por %p148, %p149
      %p151 = scmp.ne.s32.totalorder %s140, %s143
      %p152 = scmp.eq.s32.totalorder %s20, 1
      %p153 = por %p151, %p152
      %p154 = scmp.ne.s32.totalorder %s143, %s144
      %p155 = scmp.eq.s32.totalorder %s20, 0
      %p156 = por %p154, %p155
      %p157 = scmp.ne.s32.totalorder %s143, %s144
      %p158 = scmp.eq.s32.totalorder %s21, 1
      %p159 = por %p157, %p158
      %p161 = scmp.ne.s32.totalorder %s144, %s160
      %p162 = scmp.eq.s32.totalorder %s21, 0
      %p163 = por %p161, %p162
      %s164 = ssub.s32 %s22, %s34
      %s165 = ssub.s32 %s23, %s30
      %s166 = sor.u32 %s164, %s165
      %p167 = scmp.eq.s32.totalorder %s166, 0
      %s169 = sadd.s32 %s168, 1
      %s170 = scalar_select %p167, %s168, %s169
      %p173 = pneg %p167
      %p174 = scmp.eq.s32.totalorder %s15, 1
      %p175 = por %p173, %p174
      %p176 = scmp.ne.s32.totalorder %s168, %s171
      %p177 = scmp.eq.s32.totalorder %s15, 0
      %p178 = por %p176, %p177
      %p179 = scmp.ne.s32.totalorder %s168, %s171
      %p180 = scmp.eq.s32.totalorder %s20, 1
      %p181 = por %p179, %p180
      %p182 = scmp.ne.s32.totalorder %s171, %s172
      %p183 = scmp.eq.s32.totalorder %s20, 0
      %p184 = por %p182, %p183
      %p185 = scmp.ne.s32.totalorder %s171, %s172
      %p186 = scmp.eq.s32.totalorder %s21, 1
      %p187 = por %p185, %p186
      %p189 = scmp.ne.s32.totalorder %s172, %s188
      %p190 = scmp.eq.s32.totalorder %s21, 0
      %p191 = por %p189, %p190
      %p192 = scmp.le.s32.totalorder 1, %s15
      %p193 = scmp.lt.s32.totalorder %s15, 3
      %p194 = pnand %p192, %p193
      %p195 = pneg %p194
      // Predicated region
      $region9: #{tpu_custom_call.1} parent=5 // pred_check
        _
      $region10: #{tpu_custom_call.1} parent=5 // pred_check_branch
        %197 = sbr.rel (%p194) target = $region12
      $region11: #{tpu_custom_call.1} parent=5 // pred_region
        %s198 = ssub.s32 %s15, 1
        // Predicated region
        $region13: #{tpu_custom_call.1} parent=11 // pred_check
          %p199 = pneg %p48
        $region14: #{tpu_custom_call.1} parent=11 // pred_check_branch
          %201 = sbr.rel (%p199) target = $region16
        $region15: #{tpu_custom_call.1} parent=11 // pred_region
          _
        $region16: #{tpu_custom_call.1} parent=11 // pred_fallthru
          _
      $region12: #{tpu_custom_call.1} parent=5 // pred_fallthru
        _
      %p202 = scmp.lt.s32.totalorder %s15, 2
      // Predicated region
      $region17: #{tpu_custom_call.1} parent=5 // pred_check
        %p203 = pneg %p202
      $region18: #{tpu_custom_call.1} parent=5 // pred_check_branch
        %205 = sbr.rel (%p203) target = $region20
      $region19: #{tpu_custom_call.1} parent=5 // pred_region
        // Predicated region
        $region21: #{tpu_custom_call.1} parent=19 // pred_check
          %p206 = pneg %p70
        $region22: #{tpu_custom_call.1} parent=19 // pred_check_branch
          %208 = sbr.rel (%p206) target = $region24
        $region23: #{tpu_custom_call.1} parent=19 // pred_region
          %s209 = smul.u32 32, %s23
          %p210 = scmp.lt.s32.totalorder %s22, 1
          %s211 = scalar_select %p210, %s22, 1
          %p212 = scmp.lt.s32.totalorder %s209, 31
          %s213 = scalar_select %p212, %s209, 31
          %s214 = smul.addr %s211, 32
          %s215 = sadd.s32 %s213, %s214
          %s216 = smul.addr %s215, 4
          %s217 = scalar_lea.vmem %s1, %s216
          %s218 = smul.u32 32, %s23
        $region24: #{tpu_custom_call.1} parent=19 // pred_fallthru
          _
        // Predicated region
        $region25: #{tpu_custom_call.1} parent=19 // pred_check
          %p219 = pneg %p96
        $region26: #{tpu_custom_call.1} parent=19 // pred_check_branch
          %221 = sbr.rel (%p219) target = $region28
        $region27: #{tpu_custom_call.1} parent=19 // pred_region
          %p222 = scmp.lt.s32.totalorder %s22, 1
          %s223 = scalar_select %p222, %s22, 1
          %s224 = smul.addr %s223, 2
          %s225 = smul.addr %s224, 2
          %s226 = scalar_lea.vmem %s2, %s225
        $region28: #{tpu_custom_call.1} parent=19 // pred_fallthru
          _
        // Predicated region
        $region29: #{tpu_custom_call.1} parent=19 // pred_check
          %p227 = pneg %p122
        $region30: #{tpu_custom_call.1} parent=19 // pred_check_branch
          %229 = sbr.rel (%p227) target = $region32
        $region31: #{tpu_custom_call.1} parent=19 // pred_region
          %p230 = scmp.lt.s32.totalorder %s22, 1
          %s231 = scalar_select %p230, %s22, 1
          %s232 = smul.addr %s231, 2
          %s233 = smul.addr %s232, 2
          %s234 = scalar_lea.vmem %s3, %s233
        $region32: #{tpu_custom_call.1} parent=19 // pred_fallthru
          _
        // Predicated region
        $region33: #{tpu_custom_call.1} parent=19 // pred_check
          %p235 = pneg %p150
        $region34: #{tpu_custom_call.1} parent=19 // pred_check_branch
          %237 = sbr.rel (%p235) target = $region36
        $region35: #{tpu_custom_call.1} parent=19 // pred_region
          %s238 = smul.u32 2, %s23
          %p239 = scmp.lt.s32.totalorder %s22, 1
          %s240 = scalar_select %p239, %s22, 1
          %p241 = scmp.lt.s32.totalorder %s238, 1
          %s242 = scalar_select %p241, %s238, 1
          %s243 = smul.addr %s240, 2
          %s244 = sadd.s32 %s242, %s243
          %s245 = smul.addr %s244, 4
          %s246 = scalar_lea.vmem %s4, %s245
          %s247 = smul.u32 2, %s23
        $region36: #{tpu_custom_call.1} parent=19 // pred_fallthru
          _
      $region20: #{tpu_custom_call.1} parent=5 // pred_fallthru
        _
      %p248 = scmp.le.s32.totalorder 1, %s15
      %p249 = scmp.lt.s32.totalorder %s15, 3
      %p250 = pnand %p248, %p249
      %p251 = pneg %p250
      // Predicated region
      $region37: #{tpu_custom_call.1} parent=5 // pred_check
        _
      $region38: #{tpu_custom_call.1} parent=5 // pred_check_branch
        %253 = sbr.rel (%p250) target = $region40
      $region39: #{tpu_custom_call.1} parent=5 // pred_region
        %s254 = ssub.s32 %s15, 1
        %p255 = pneg %p48
        %p256 = pneg %p45
        %s257 = smul.u32 32, %s25
        %p258 = scmp.lt.s32.totalorder %s24, 1
        %s259 = scalar_select %p258, %s24, 1
        %p260 = scmp.lt.s32.totalorder %s257, 31
        %s261 = scalar_select %p260, %s257, 31
        %s262 = smul.addr %s259, 32
        %s263 = sadd.s32 %s261, %s262
        %s264 = smul.addr %s263, 4
        %s265 = scalar_lea.vmem %s1, %s264
        %p266 = pneg %p76
        %p267 = pneg %p73
        %p268 = scmp.lt.s32.totalorder %s24, 1
        %s269 = scalar_select %p268, %s24, 1
        %s270 = smul.addr %s269, 2
        %s271 = smul.addr %s270, 2
        %s272 = scalar_lea.vmem %s2, %s271
        %p273 = pneg %p102
        %p274 = pneg %p99
        %p275 = scmp.lt.s32.totalorder %s24, 1
        %s276 = scalar_select %p275, %s24, 1
        %s277 = smul.addr %s276, 2
        %s278 = smul.addr %s277, 2
        %s279 = scalar_lea.vmem %s3, %s278
        %p280 = pneg %p128
        %p281 = pneg %p125
        %s282 = smul.u32 2, %s25
        %p283 = scmp.lt.s32.totalorder %s24, 1
        %s284 = scalar_select %p283, %s24, 1
        %p285 = scmp.lt.s32.totalorder %s282, 1
        %s286 = scalar_select %p285, %s282, 1
        %s287 = smul.addr %s284, 2
        %s288 = sadd.s32 %s286, %s287
        %s289 = smul.addr %s288, 4
        %s290 = scalar_lea.vmem %s4, %s289
        %p291 = pneg %p156
        %p292 = pneg %p153
        %p293 = pneg %p184
        %p294 = pneg %p181
        %s295 = sand.u32 %s171, 1
        %s296 = scalar_lea.sflag [#allocation4], %s295
        %s297 = sand.u32 %s171, 1
        %s298 = smul.addr %s297, 8
        %s299 = scalar_lea.vmem [#allocation3], %s298
        %s300 = smul.u32 32, %s25
        %p301 = scmp.lt.s32.totalorder %s24, 1
        %s302 = scalar_select %p301, %s24, 1
        %p303 = scmp.lt.s32.totalorder %s300, 31
        %s304 = scalar_select %p303, %s300, 31
        %s305 = smul.addr %s302, 32
        %s306 = sadd.s32 %s304, %s305
        %s307 = smul.addr %s306, 4
        %s308 = scalar_lea.vmem %s1, %s307
        %s309 = smul.u32 32, %s25
        %p310 = scmp.lt.s32.totalorder %s24, 1
        %s311 = scalar_select %p310, %s24, 1
        %s312 = smul.addr %s311, 2
        %s313 = smul.addr %s312, 2
        %s314 = scalar_lea.vmem %s2, %s313
        %p315 = scmp.lt.s32.totalorder %s24, 1
        %s316 = scalar_select %p315, %s24, 1
        %s317 = smul.addr %s316, 2
        %s318 = smul.addr %s317, 2
        %s319 = scalar_lea.vmem %s3, %s318
        %s320 = smul.u32 2, %s25
        %p321 = scmp.lt.s32.totalorder %s24, 1
        %s322 = scalar_select %p321, %s24, 1
        %p323 = scmp.lt.s32.totalorder %s320, 1
        %s324 = scalar_select %p323, %s320, 1
        %s325 = smul.addr %s322, 2
        %s326 = sadd.s32 %s324, %s325
        %s327 = smul.addr %s326, 4
        %s328 = scalar_lea.vmem %s4, %s327
        %s329 = smul.u32 2, %s25
        %s330 = smul.u32 2, %s25
        %v333 = vld [vmem:[%s308] sm:$0xf]
        %v334 = vld [vmem:[%s308 + $0x4] sm:$0xf]
        %v335 = vld [vmem:[%s308 + $0x8] sm:$0xf]
        %v336 = vld [vmem:[%s308 + $0xc] sm:$0xf]
        %v337 = vld [vmem:[%s308 + $0x10] sm:$0xf]
        %v338 = vld [vmem:[%s308 + $0x14] sm:$0xf]
        %v339 = vld [vmem:[%s308 + $0x18] sm:$0xf]
        %v340 = vld [vmem:[%s308 + $0x1c] sm:$0xf]
        %v341 = vld [vmem:[%s308 + $0x20] sm:$0xf]
        %v342 = vld [vmem:[%s308 + $0x24] sm:$0xf]
        %v343 = vld [vmem:[%s308 + $0x28] sm:$0xf]
        %v344 = vld [vmem:[%s308 + $0x2c] sm:$0xf]
        %v345 = vld [vmem:[%s308 + $0x30] sm:$0xf]
        %v346 = vld [vmem:[%s308 + $0x34] sm:$0xf]
        %v347 = vld [vmem:[%s308 + $0x38] sm:$0xf]
        %v348 = vld [vmem:[%s308 + $0x3c] sm:$0xf]
        %v349 = vld [vmem:[%s308 + $0x40] sm:$0xf]
        %v350 = vld [vmem:[%s308 + $0x44] sm:$0xf]
        %v351 = vld [vmem:[%s308 + $0x48] sm:$0xf]
        %v352 = vld [vmem:[%s308 + $0x4c] sm:$0xf]
        %v353 = vld [vmem:[%s308 + $0x50] sm:$0xf]
        %v354 = vld [vmem:[%s308 + $0x54] sm:$0xf]
        %v355 = vld [vmem:[%s308 + $0x58] sm:$0xf]
        %v356 = vld [vmem:[%s308 + $0x5c] sm:$0xf]
        %v357 = vld [vmem:[%s308 + $0x60] sm:$0xf]
        %v358 = vld [vmem:[%s308 + $0x64] sm:$0xf]
        %v359 = vld [vmem:[%s308 + $0x68] sm:$0xf]
        %v360 = vld [vmem:[%s308 + $0x6c] sm:$0xf]
        %v361 = vld [vmem:[%s308 + $0x70] sm:$0xf]
        %v362 = vld [vmem:[%s308 + $0x74] sm:$0xf]
        %v363 = vld [vmem:[%s308 + $0x78] sm:$0xf]
        %v364 = vld [vmem:[%s308 + $0x7c] sm:$0xf]
        %v365 = vld [vmem:[%s314] sm:$0xf]
        %v366 = vld [vmem:[%s319] sm:$0xf]
        %v367 = vld [vmem:[%s328] sm:$0xff]
        %v400 = vunpack.c.l.b16 %v333
        %v401 = vunpack.c.l.b16 %v334
        %v402 = vunpack.c.l.b16 %v335
        %v403 = vunpack.c.l.b16 %v336
        %v404 = vunpack.c.l.b16 %v337
        %v405 = vunpack.c.l.b16 %v338
        %v406 = vunpack.c.l.b16 %v339
        %v407 = vunpack.c.l.b16 %v340
        %v408 = vunpack.c.l.b16 %v341
        %v409 = vunpack.c.l.b16 %v342
        %v410 = vunpack.c.l.b16 %v343
        %v411 = vunpack.c.l.b16 %v344
        %v412 = vunpack.c.l.b16 %v345
        %v413 = vunpack.c.l.b16 %v346
        %v414 = vunpack.c.l.b16 %v347
        %v415 = vunpack.c.l.b16 %v348
        %v416 = vunpack.c.l.b16 %v349
        %v417 = vunpack.c.l.b16 %v350
        %v418 = vunpack.c.l.b16 %v351
        %v419 = vunpack.c.l.b16 %v352
        %v420 = vunpack.c.l.b16 %v353
        %v421 = vunpack.c.l.b16 %v354
        %v422 = vunpack.c.l.b16 %v355
        %v423 = vunpack.c.l.b16 %v356
        %v424 = vunpack.c.l.b16 %v357
        %v425 = vunpack.c.l.b16 %v358
        %v426 = vunpack.c.l.b16 %v359
        %v427 = vunpack.c.l.b16 %v360
        %v428 = vunpack.c.l.b16 %v361
        %v429 = vunpack.c.l.b16 %v362
        %v430 = vunpack.c.l.b16 %v363
        %v431 = vunpack.c.l.b16 %v364
        %v432 = vpack.c.b16 %v401, %v400
        %v433 = vpack.c.b16 %v403, %v402
        %v434 = vpack.c.b16 %v405, %v404
        %v435 = vpack.c.b16 %v407, %v406
        %v436 = vpack.c.b16 %v409, %v408
        %v437 = vpack.c.b16 %v411, %v410
        %v438 = vpack.c.b16 %v413, %v412
        %v439 = vpack.c.b16 %v415, %v414
        %v440 = vpack.c.b16 %v417, %v416
        %v441 = vpack.c.b16 %v419, %v418
        %v442 = vpack.c.b16 %v421, %v420
        %v443 = vpack.c.b16 %v423, %v422
        %v444 = vpack.c.b16 %v425, %v424
        %v445 = vpack.c.b16 %v427, %v426
        %v446 = vpack.c.b16 %v429, %v428
        %v447 = vpack.c.b16 %v431, %v430
        %v450 = vunpack.c.l.s4 1983009808
        %v451 = vunpack.c.0.s8 %v450
        %v452 = vlaneseq
        %v453 = vshrl.u32 %v452, 7
        %v454 = vsub.s32 %v451, %v453
        %v455 = vrot.slane %v365, %v454
        %v456 = vcombine.high %v455, %v455
        %vm457 = vcmask 31744
        %v459 = vsel %vm457, %v432, 0
        %v462 = vsel %vm457, %v433, 0
        %v465 = vsel %vm457, %v434, 0
        %v468 = vsel %vm457, %v435, 0
        %v471 = vsel %vm457, %v436, 0
        %v474 = vsel %vm457, %v437, 0
        %v477 = vsel %vm457, %v438, 0
        %v480 = vsel %vm457, %v439, 0
        %v483 = vsel %vm457, %v440, 0
        %v486 = vsel %vm457, %v441, 0
        %v489 = vsel %vm457, %v442, 0
        %v492 = vsel %vm457, %v443, 0
        %v495 = vsel %vm457, %v444, 0
        %v498 = vsel %vm457, %v445, 0
        %v501 = vsel %vm457, %v446, 0
        %v504 = vsel %vm457, %v447, 0
        %vm506 = vcmask 1041408
        %v508 = vsel %vm506, %v455, 0
        %v511 = vsel %vm506, %v456, 0
        %513 = vmatprep.subr.bf16.mxu0 %v511
        %514 = vmatpush1.bf16.msra.mxu0 %v508
        %515 = vmatprep.subr.bf16.mxu0 0
        %516 = vmatpush1.bf16.msra.mxu0 0
        %517 = vmatprep.subr.bf16.mxu0 0
        %518 = vmatpush1.bf16.msra.mxu0 0
        %519 = vmatprep.subr.bf16.mxu0 0
        %520 = vmatpush1.bf16.msra.mxu0 0
        %521 = vmatprep.subr.bf16.mxu0 0
        %522 = vmatpush1.bf16.msra.mxu0 0
        %523 = vmatprep.subr.bf16.mxu0 0
        %524 = vmatpush1.bf16.msra.mxu0 0
        %525 = vmatprep.subr.bf16.mxu0 0
        %526 = vmatpush1.bf16.msra.mxu0 0
        %527 = vmatprep.subr.bf16.mxu0 0
        %528 = vmatpush1.bf16.msra.mxu0 0
        %529 = vmatprep.subr.bf16.mxu0 0
        %530 = vmatpush1.bf16.msra.mxu0 0
        %531 = vmatprep.subr.bf16.mxu0 0
        %532 = vmatpush1.bf16.msra.mxu0 0
        %533 = vmatprep.subr.bf16.mxu0 0
        %534 = vmatpush1.bf16.msra.mxu0 0
        %535 = vmatprep.subr.bf16.mxu0 0
        %536 = vmatpush1.bf16.msra.mxu0 0
        %537 = vmatprep.subr.bf16.mxu0 0
        %538 = vmatpush1.bf16.msra.mxu0 0
        %539 = vmatprep.subr.bf16.mxu0 0
        %540 = vmatpush1.bf16.msra.mxu0 0
        %541 = vmatprep.subr.bf16.mxu0 0
        %542 = vmatpush1.bf16.msra.mxu0 0
        %543 = vmatprep.subr.bf16.mxu0 0
        %544 = vmatpush1.bf16.msra.mxu0 0
        %545 = vmatprep.mubr.bf16.mxu0 0
        %546 = vmatmul.mubr.bf16.gmra.mrb[0].mxu0 %v459
        %v547 = vpop.f32.mrb[0].mxu0
        %v548 = vadd.f32 0.0, %v547
        %v549 = vpop.f32.mrb[0].mxu0
        %v550 = vadd.f32 0.0, %v549
        %v551 = vpop.f32.mrb[0].mxu0
        %v552 = vadd.f32 0.0, %v551
        %v553 = vpop.f32.mrb[0].mxu0
        %v554 = vadd.f32 0.0, %v553
        %555 = vmatprep.mubr.bf16.mxu0 0
        %556 = vmatmul.mubr.bf16.gmra.mrb[0].mxu0 %v462
        %v557 = vpop.f32.mrb[0].mxu0
        %v558 = vadd.f32 0.0, %v557
        %v559 = vpop.f32.mrb[0].mxu0
        %v560 = vadd.f32 0.0, %v559
        %v561 = vpop.f32.mrb[0].mxu0
        %v562 = vadd.f32 0.0, %v561
        %v563 = vpop.f32.mrb[0].mxu0
        %v564 = vadd.f32 0.0, %v563
        %565 = vmatprep.mubr.bf16.mxu0 0
        %566 = vmatmul.mubr.bf16.gmra.mrb[0].mxu0 %v465
        %v567 = vpop.f32.mrb[0].mxu0
        %v568 = vadd.f32 0.0, %v567
        %v569 = vpop.f32.mrb[0].mxu0
        %v570 = vadd.f32 0.0, %v569
        %v571 = vpop.f32.mrb[0].mxu0
        %v572 = vadd.f32 0.0, %v571
        %v573 = vpop.f32.mrb[0].mxu0
        %v574 = vadd.f32 0.0, %v573
        %575 = vmatprep.mubr.bf16.mxu0 0
        %576 = vmatmul.mubr.bf16.gmra.mrb[0].mxu0 %v468
        %v577 = vpop.f32.mrb[0].mxu0
        %v578 = vadd.f32 0.0, %v577
        %v579 = vpop.f32.mrb[0].mxu0
        %v580 = vadd.f32 0.0, %v579
        %v581 = vpop.f32.mrb[0].mxu0
        %v582 = vadd.f32 0.0, %v581
        %v583 = vpop.f32.mrb[0].mxu0
        %v584 = vadd.f32 0.0, %v583
        %585 = vmatprep.mubr.bf16.mxu0 0
        %586 = vmatmul.mubr.bf16.gmra.mrb[0].mxu0 %v471
        %v587 = vpop.f32.mrb[0].mxu0
        %v588 = vadd.f32 0.0, %v587
        %v589 = vpop.f32.mrb[0].mxu0
        %v590 = vadd.f32 0.0, %v589
        %v591 = vpop.f32.mrb[0].mxu0
        %v592 = vadd.f32 0.0, %v591
        %v593 = vpop.f32.mrb[0].mxu0
        %v594 = vadd.f32 0.0, %v593
        %595 = vmatprep.mubr.bf16.mxu0 0
        %596 = vmatmul.mubr.bf16.gmra.mrb[0].mxu0 %v474
        %v597 = vpop.f32.mrb[0].mxu0
        %v598 = vadd.f32 0.0, %v597
        %v599 = vpop.f32.mrb[0].mxu0
        %v600 = vadd.f32 0.0, %v599
        %v601 = vpop.f32.mrb[0].mxu0
        %v602 = vadd.f32 0.0, %v601
        %v603 = vpop.f32.mrb[0].mxu0
        %v604 = vadd.f32 0.0, %v603
        %605 = vmatprep.mubr.bf16.mxu0 0
        %606 = vmatmul.mubr.bf16.gmra.mrb[0].mxu0 %v477
        %v607 = vpop.f32.mrb[0].mxu0
        %v608 = vadd.f32 0.0, %v607
        %v609 = vpop.f32.mrb[0].mxu0
        %v610 = vadd.f32 0.0, %v609
        %v611 = vpop.f32.mrb[0].mxu0
        %v612 = vadd.f32 0.0, %v611
        %v613 = vpop.f32.mrb[0].mxu0
        %v614 = vadd.f32 0.0, %v613
        %615 = vmatprep.mubr.bf16.mxu0 0
        %616 = vmatmul.mubr.bf16.gmra.mrb[0].mxu0 %v480
        %v617 = vpop.f32.mrb[0].mxu0
        %v618 = vadd.f32 0.0, %v617
        %v619 = vpop.f32.mrb[0].mxu0
        %v620 = vadd.f32 0.0, %v619
        %v621 = vpop.f32.mrb[0].mxu0
        %v622 = vadd.f32 0.0, %v621
        %v623 = vpop.f32.mrb[0].mxu0
        %v624 = vadd.f32 0.0, %v623
        %625 = vmatprep.mubr.bf16.mxu0 0
        %626 = vmatmul.mubr.bf16.gmra.mrb[0].mxu0 %v483
        %v627 = vpop.f32.mrb[0].mxu0
        %v628 = vadd.f32 0.0, %v627
        %v629 = vpop.f32.mrb[0].mxu0
        %v630 = vadd.f32 0.0, %v629
        %v631 = vpop.f32.mrb[0].mxu0
        %v632 = vadd.f32 0.0, %v631
        %v633 = vpop.f32.mrb[0].mxu0
        %v634 = vadd.f32 0.0, %v633
        %635 = vmatprep.mubr.bf16.mxu0 0
        %636 = vmatmul.mubr.bf16.gmra.mrb[0].mxu0 %v486
        %v637 = vpop.f32.mrb[0].mxu0
        %v638 = vadd.f32 0.0, %v637
        %v639 = vpop.f32.mrb[0].mxu0
        %v640 = vadd.f32 0.0, %v639
        %v641 = vpop.f32.mrb[0].mxu0
        %v642 = vadd.f32 0.0, %v641
        %v643 = vpop.f32.mrb[0].mxu0
        %v644 = vadd.f32 0.0, %v643
        %645 = vmatprep.mubr.bf16.mxu0 0
        %646 = vmatmul.mubr.bf16.gmra.mrb[0].mxu0 %v489
        %v647 = vpop.f32.mrb[0].mxu0
        %v648 = vadd.f32 0.0, %v647
        %v649 = vpop.f32.mrb[0].mxu0
        %v650 = vadd.f32 0.0, %v649
        %v651 = vpop.f32.mrb[0].mxu0
        %v652 = vadd.f32 0.0, %v651
        %v653 = vpop.f32.mrb[0].mxu0
        %v654 = vadd.f32 0.0, %v653
        %655 = vmatprep.mubr.bf16.mxu0 0
        %656 = vmatmul.mubr.bf16.gmra.mrb[0].mxu0 %v492
        %v657 = vpop.f32.mrb[0].mxu0
        %v658 = vadd.f32 0.0, %v657
        %v659 = vpop.f32.mrb[0].mxu0
        %v660 = vadd.f32 0.0, %v659
        %v661 = vpop.f32.mrb[0].mxu0
        %v662 = vadd.f32 0.0, %v661
        %v663 = vpop.f32.mrb[0].mxu0
        %v664 = vadd.f32 0.0, %v663
        %665 = vmatprep.mubr.bf16.mxu0 0
        %666 = vmatmul.mubr.bf16.gmra.mrb[0].mxu0 %v495
        %v667 = vpop.f32.mrb[0].mxu0
        %v668 = vadd.f32 0.0, %v667
        %v669 = vpop.f32.mrb[0].mxu0
        %v670 = vadd.f32 0.0, %v669
        %v671 = vpop.f32.mrb[0].mxu0
        %v672 = vadd.f32 0.0, %v671
        %v673 = vpop.f32.mrb[0].mxu0
        %v674 = vadd.f32 0.0, %v673
        %675 = vmatprep.mubr.bf16.mxu0 0
        %676 = vmatmul.mubr.bf16.gmra.mrb[0].mxu0 %v498
        %v677 = vpop.f32.mrb[0].mxu0
        %v678 = vadd.f32 0.0, %v677
        %v679 = vpop.f32.mrb[0].mxu0
        %v680 = vadd.f32 0.0, %v679
        %v681 = vpop.f32.mrb[0].mxu0
        %v682 = vadd.f32 0.0, %v681
        %v683 = vpop.f32.mrb[0].mxu0
        %v684 = vadd.f32 0.0, %v683
        %685 = vmatprep.mubr.bf16.mxu0 0
        %686 = vmatmul.mubr.bf16.gmra.mrb[0].mxu0 %v501
        %v687 = vpop.f32.mrb[0].mxu0
        %v688 = vadd.f32 0.0, %v687
        %v689 = vpop.f32.mrb[0].mxu0
        %v690 = vadd.f32 0.0, %v689
        %v691 = vpop.f32.mrb[0].mxu0
        %v692 = vadd.f32 0.0, %v691
        %v693 = vpop.f32.mrb[0].mxu0
        %v694 = vadd.f32 0.0, %v693
        %695 = vmatprep.mubr.bf16.mxu0 0
        %696 = vmatmul.mubr.bf16.gmra.mrb[0].mxu0 %v504
        %v697 = vpop.f32.mrb[0].mxu0
        %v698 = vadd.f32 0.0, %v697
        %v699 = vpop.f32.mrb[0].mxu0
        %v700 = vadd.f32 0.0, %v699
        %v701 = vpop.f32.mrb[0].mxu0
        %v702 = vadd.f32 0.0, %v701
        %v703 = vpop.f32.mrb[0].mxu0
        %v704 = vadd.f32 0.0, %v703
        %705 = vdwg.mxu0
        %v706 = vmax.f32 %v548, %v550
        %707 = vmax.xlane.f32.xlu0 %v706
        %v708 = vpop.xlane.xlu0 %707
        %v709 = vmax.f32 %v552, %v554
        %710 = vmax.xlane.f32.xlu0 %v709
        %v711 = vpop.xlane.xlu0 %710
        %v712 = vmax.f32 %v558, %v560
        %713 = vmax.xlane.f32.xlu0 %v712
        %v714 = vpop.xlane.xlu0 %713
        %v715 = vmax.f32 %v562, %v564
        %716 = vmax.xlane.f32.xlu0 %v715
        %v717 = vpop.xlane.xlu0 %716
        %v718 = vmax.f32 %v568, %v570
        %719 = vmax.xlane.f32.xlu0 %v718
        %v720 = vpop.xlane.xlu0 %719
        %v721 = vmax.f32 %v572, %v574
        %722 = vmax.xlane.f32.xlu0 %v721
        %v723 = vpop.xlane.xlu0 %722
        %v724 = vmax.f32 %v578, %v580
        %725 = vmax.xlane.f32.xlu0 %v724
        %v726 = vpop.xlane.xlu0 %725
        %v727 = vmax.f32 %v582, %v584
        %728 = vmax.xlane.f32.xlu0 %v727
        %v729 = vpop.xlane.xlu0 %728
        %v730 = vmax.f32 %v588, %v590
        %731 = vmax.xlane.f32.xlu0 %v730
        %v732 = vpop.xlane.xlu0 %731
        %v733 = vmax.f32 %v592, %v594
        %734 = vmax.xlane.f32.xlu0 %v733
        %v735 = vpop.xlane.xlu0 %734
        %v736 = vmax.f32 %v598, %v600
        %737 = vmax.xlane.f32.xlu0 %v736
        %v738 = vpop.xlane.xlu0 %737
        %v739 = vmax.f32 %v602, %v604
        %740 = vmax.xlane.f32.xlu0 %v739
        %v741 = vpop.xlane.xlu0 %740
        %v742 = vmax.f32 %v608, %v610
        %743 = vmax.xlane.f32.xlu0 %v742
        %v744 = vpop.xlane.xlu0 %743
        %v745 = vmax.f32 %v612, %v614
        %746 = vmax.xlane.f32.xlu0 %v745
        %v747 = vpop.xlane.xlu0 %746
        %v748 = vmax.f32 %v618, %v620
        %749 = vmax.xlane.f32.xlu0 %v748
        %v750 = vpop.xlane.xlu0 %749
        %v751 = vmax.f32 %v622, %v624
        %752 = vmax.xlane.f32.xlu0 %v751
        %v753 = vpop.xlane.xlu0 %752
        %v754 = vmax.f32 %v628, %v630
        %755 = vmax.xlane.f32.xlu0 %v754
        %v756 = vpop.xlane.xlu0 %755
        %v757 = vmax.f32 %v632, %v634
        %758 = vmax.xlane.f32.xlu0 %v757
        %v759 = vpop.xlane.xlu0 %758
        %v760 = vmax.f32 %v638, %v640
        %761 = vmax.xlane.f32.xlu0 %v760
        %v762 = vpop.xlane.xlu0 %761
        %v763 = vmax.f32 %v642, %v644
        %764 = vmax.xlane.f32.xlu0 %v763
        %v765 = vpop.xlane.xlu0 %764
        %v766 = vmax.f32 %v648, %v650
        %767 = vmax.xlane.f32.xlu0 %v766
        %v768 = vpop.xlane.xlu0 %767
        %v769 = vmax.f32 %v652, %v654
        %770 = vmax.xlane.f32.xlu0 %v769
        %v771 = vpop.xlane.xlu0 %770
        %v772 = vmax.f32 %v658, %v660
        %773 = vmax.xlane.f32.xlu0 %v772
        %v774 = vpop.xlane.xlu0 %773
        %v775 = vmax.f32 %v662, %v664
        %776 = vmax.xlane.f32.xlu0 %v775
        %v777 = vpop.xlane.xlu0 %776
        %v778 = vmax.f32 %v668, %v670
        %779 = vmax.xlane.f32.xlu0 %v778
        %v780 = vpop.xlane.xlu0 %779
        %v781 = vmax.f32 %v672, %v674
        %782 = vmax.xlane.f32.xlu0 %v781
        %v783 = vpop.xlane.xlu0 %782
        %v784 = vmax.f32 %v678, %v680
        %785 = vmax.xlane.f32.xlu0 %v784
        %v786 = vpop.xlane.xlu0 %785
        %v787 = vmax.f32 %v682, %v684
        %788 = vmax.xlane.f32.xlu0 %v787
        %v789 = vpop.xlane.xlu0 %788
        %v790 = vmax.f32 %v688, %v690
        %791 = vmax.xlane.f32.xlu0 %v790
        %v792 = vpop.xlane.xlu0 %791
        %v793 = vmax.f32 %v692, %v694
        %794 = vmax.xlane.f32.xlu0 %v793
        %v795 = vpop.xlane.xlu0 %794
        %v796 = vmax.f32 %v698, %v700
        %797 = vmax.xlane.f32.xlu0 %v796
        %v798 = vpop.xlane.xlu0 %797
        %v799 = vmax.f32 %v702, %v704
        %800 = vmax.xlane.f32.xlu0 %v799
        %v801 = vpop.xlane.xlu0 %800
        %v802 = vsub.f32 %v548, %v708
        %v803 = vsub.f32 %v550, %v708
        %v804 = vsub.f32 %v552, %v711
        %v805 = vsub.f32 %v554, %v711
        %v806 = vsub.f32 %v558, %v714
        %v807 = vsub.f32 %v560, %v714
        %v808 = vsub.f32 %v562, %v717
        %v809 = vsub.f32 %v564, %v717
        %v810 = vsub.f32 %v568, %v720
        %v811 = vsub.f32 %v570, %v720
        %v812 = vsub.f32 %v572, %v723
        %v813 = vsub.f32 %v574, %v723
        %v814 = vsub.f32 %v578, %v726
        %v815 = vsub.f32 %v580, %v726
        %v816 = vsub.f32 %v582, %v729
        %v817 = vsub.f32 %v584, %v729
        %v818 = vsub.f32 %v588, %v732
        %v819 = vsub.f32 %v590, %v732
        %v820 = vsub.f32 %v592, %v735
        %v821 = vsub.f32 %v594, %v735
        %v822 = vsub.f32 %v598, %v738
        %v823 = vsub.f32 %v600, %v738
        %v824 = vsub.f32 %v602, %v741
        %v825 = vsub.f32 %v604, %v741
        %v826 = vsub.f32 %v608, %v744
        %v827 = vsub.f32 %v610, %v744
        %v828 = vsub.f32 %v612, %v747
        %v829 = vsub.f32 %v614, %v747
        %v830 = vsub.f32 %v618, %v750
        %v831 = vsub.f32 %v620, %v750
        %v832 = vsub.f32 %v622, %v753
        %v833 = vsub.f32 %v624, %v753
        %v834 = vsub.f32 %v628, %v756
        %v835 = vsub.f32 %v630, %v756
        %v836 = vsub.f32 %v632, %v759
        %v837 = vsub.f32 %v634, %v759
        %v838 = vsub.f32 %v638, %v762
        %v839 = vsub.f32 %v640, %v762
        %v840 = vsub.f32 %v642, %v765
        %v841 = vsub.f32 %v644, %v765
        %v842 = vsub.f32 %v648, %v768
        %v843 = vsub.f32 %v650, %v768
        %v844 = vsub.f32 %v652, %v771
        %v845 = vsub.f32 %v654, %v771
        %v846 = vsub.f32 %v658, %v774
        %v847 = vsub.f32 %v660, %v774
        %v848 = vsub.f32 %v662, %v777
        %v849 = vsub.f32 %v664, %v777
        %v850 = vsub.f32 %v668, %v780
        %v851 = vsub.f32 %v670, %v780
        %v852 = vsub.f32 %v672, %v783
        %v853 = vsub.f32 %v674, %v783
        %v854 = vsub.f32 %v678, %v786
        %v855 = vsub.f32 %v680, %v786
        %v856 = vsub.f32 %v682, %v789
        %v857 = vsub.f32 %v684, %v789
        %v858 = vsub.f32 %v688, %v792
        %v859 = vsub.f32 %v690, %v792
        %v860 = vsub.f32 %v692, %v795
        %v861 = vsub.f32 %v694, %v795
        %v862 = vsub.f32 %v698, %v798
        %v863 = vsub.f32 %v700, %v798
        %v864 = vsub.f32 %v702, %v801
        %v865 = vsub.f32 %v704, %v801
        %v866 = vmul.f32 %v802, 1.442695
        %v867 = vpow.pop %v866
        %v868 = vmul.f32 %v803, 1.442695
        %v869 = vpow.pop %v868
        %v870 = vmul.f32 %v804, 1.442695
        %v871 = vpow.pop %v870
        %v872 = vmul.f32 %v805, 1.442695
        %v873 = vpow.pop %v872
        %v874 = vmul.f32 %v806, 1.442695
        %v875 = vpow.pop %v874
        %v876 = vmul.f32 %v807, 1.442695
        %v877 = vpow.pop %v876
        %v878 = vmul.f32 %v808, 1.442695
        %v879 = vpow.pop %v878
        %v880 = vmul.f32 %v809, 1.442695
        %v881 = vpow.pop %v880
        %v882 = vmul.f32 %v810, 1.442695
        %v883 = vpow.pop %v882
        %v884 = vmul.f32 %v811, 1.442695
        %v885 = vpow.pop %v884
        %v886 = vmul.f32 %v812, 1.442695
        %v887 = vpow.pop %v886
        %v888 = vmul.f32 %v813, 1.442695
        %v889 = vpow.pop %v888
        %v890 = vmul.f32 %v814, 1.442695
        %v891 = vpow.pop %v890
        %v892 = vmul.f32 %v815, 1.442695
        %v893 = vpow.pop %v892
        %v894 = vmul.f32 %v816, 1.442695
        %v895 = vpow.pop %v894
        %v896 = vmul.f32 %v817, 1.442695
        %v897 = vpow.pop %v896
        %v898 = vmul.f32 %v818, 1.442695
        %v899 = vpow.pop %v898
        %v900 = vmul.f32 %v819, 1.442695
        %v901 = vpow.pop %v900
        %v902 = vmul.f32 %v820, 1.442695
        %v903 = vpow.pop %v902
        %v904 = vmul.f32 %v821, 1.442695
        %v905 = vpow.pop %v904
        %v906 = vmul.f32 %v822, 1.442695
        %v907 = vpow.pop %v906
        %v908 = vmul.f32 %v823, 1.442695
        %v909 = vpow.pop %v908
        %v910 = vmul.f32 %v824, 1.442695
        %v911 = vpow.pop %v910
        %v912 = vmul.f32 %v825, 1.442695
        %v913 = vpow.pop %v912
        %v914 = vmul.f32 %v826, 1.442695
        %v915 = vpow.pop %v914
        %v916 = vmul.f32 %v827, 1.442695
        %v917 = vpow.pop %v916
        %v918 = vmul.f32 %v828, 1.442695
        %v919 = vpow.pop %v918
        %v920 = vmul.f32 %v829, 1.442695
        %v921 = vpow.pop %v920
        %v922 = vmul.f32 %v830, 1.442695
        %v923 = vpow.pop %v922
        %v924 = vmul.f32 %v831, 1.442695
        %v925 = vpow.pop %v924
        %v926 = vmul.f32 %v832, 1.442695
        %v927 = vpow.pop %v926
        %v928 = vmul.f32 %v833, 1.442695
        %v929 = vpow.pop %v928
        %v930 = vmul.f32 %v834, 1.442695
        %v931 = vpow.pop %v930
        %v932 = vmul.f32 %v835, 1.442695
        %v933 = vpow.pop %v932
        %v934 = vmul.f32 %v836, 1.442695
        %v935 = vpow.pop %v934
        %v936 = vmul.f32 %v837, 1.442695
        %v937 = vpow.pop %v936
        %v938 = vmul.f32 %v838, 1.442695
        %v939 = vpow.pop %v938
        %v940 = vmul.f32 %v839, 1.442695
        %v941 = vpow.pop %v940
        %v942 = vmul.f32 %v840, 1.442695
        %v943 = vpow.pop %v942
        %v944 = vmul.f32 %v841, 1.442695
        %v945 = vpow.pop %v944
        %v946 = vmul.f32 %v842, 1.442695
        %v947 = vpow.pop %v946
        %v948 = vmul.f32 %v843, 1.442695
        %v949 = vpow.pop %v948
        %v950 = vmul.f32 %v844, 1.442695
        %v951 = vpow.pop %v950
        %v952 = vmul.f32 %v845, 1.442695
        %v953 = vpow.pop %v952
        %v954 = vmul.f32 %v846, 1.442695
        %v955 = vpow.pop %v954
        %v956 = vmul.f32 %v847, 1.442695
        %v957 = vpow.pop %v956
        %v958 = vmul.f32 %v848, 1.442695
        %v959 = vpow.pop %v958
        %v960 = vmul.f32 %v849, 1.442695
        %v961 = vpow.pop %v960
        %v962 = vmul.f32 %v850, 1.442695
        %v963 = vpow.pop %v962
        %v964 = vmul.f32 %v851, 1.442695
        %v965 = vpow.pop %v964
        %v966 = vmul.f32 %v852, 1.442695
        %v967 = vpow.pop %v966
        %v968 = vmul.f32 %v853, 1.442695
        %v969 = vpow.pop %v968
        %v970 = vmul.f32 %v854, 1.442695
        %v971 = vpow.pop %v970
        %v972 = vmul.f32 %v855, 1.442695
        %v973 = vpow.pop %v972
        %v974 = vmul.f32 %v856, 1.442695
        %v975 = vpow.pop %v974
        %v976 = vmul.f32 %v857, 1.442695
        %v977 = vpow.pop %v976
        %v978 = vmul.f32 %v858, 1.442695
        %v979 = vpow.pop %v978
        %v980 = vmul.f32 %v859, 1.442695
        %v981 = vpow.pop %v980
        %v982 = vmul.f32 %v860, 1.442695
        %v983 = vpow.pop %v982
        %v984 = vmul.f32 %v861, 1.442695
        %v985 = vpow.pop %v984
        %v986 = vmul.f32 %v862, 1.442695
        %v987 = vpow.pop %v986
        %v988 = vmul.f32 %v863, 1.442695
        %v989 = vpow.pop %v988
        %v990 = vmul.f32 %v864, 1.442695
        %v991 = vpow.pop %v990
        %v992 = vmul.f32 %v865, 1.442695
        %v993 = vpow.pop %v992
        %v994 = vpack.c.bf16 %v871, %v867
        %v995 = vpack.c.bf16 %v873, %v869
        %v996 = vpack.c.bf16 %v879, %v875
        %v997 = vpack.c.bf16 %v881, %v877
        %v998 = vpack.c.bf16 %v887, %v883
        %v999 = vpack.c.bf16 %v889, %v885
        %v1000 = vpack.c.bf16 %v895, %v891
        %v1001 = vpack.c.bf16 %v897, %v893
        %v1002 = vpack.c.bf16 %v903, %v899
        %v1003 = vpack.c.bf16 %v905, %v901
        %v1004 = vpack.c.bf16 %v911, %v907
        %v1005 = vpack.c.bf16 %v913, %v909
        %v1006 = vpack.c.bf16 %v919, %v915
        %v1007 = vpack.c.bf16 %v921, %v917
        %v1008 = vpack.c.bf16 %v927, %v923
        %v1009 = vpack.c.bf16 %v929, %v925
        %v1010 = vpack.c.bf16 %v935, %v931
        %v1011 = vpack.c.bf16 %v937, %v933
        %v1012 = vpack.c.bf16 %v943, %v939
        %v1013 = vpack.c.bf16 %v945, %v941
        %v1014 = vpack.c.bf16 %v951, %v947
        %v1015 = vpack.c.bf16 %v953, %v949
        %v1016 = vpack.c.bf16 %v959, %v955
        %v1017 = vpack.c.bf16 %v961, %v957
        %v1018 = vpack.c.bf16 %v967, %v963
        %v1019 = vpack.c.bf16 %v969, %v965
        %v1020 = vpack.c.bf16 %v975, %v971
        %v1021 = vpack.c.bf16 %v977, %v973
        %v1022 = vpack.c.bf16 %v983, %v979
        %v1023 = vpack.c.bf16 %v985, %v981
        %v1024 = vpack.c.bf16 %v991, %v987
        %v1025 = vpack.c.bf16 %v993, %v989
        %v1028 = vunpack.c.l.s4 1983009808
        %v1029 = vunpack.c.0.s8 %v1028
        %v1030 = vlaneseq
        %v1031 = vshrl.u32 %v1030, 7
        %v1032 = vsub.s32 %v1029, %v1031
        %v1033 = vrot.slane %v366, %v1032
        %v1034 = vcombine.high %v1033, %v1033
        %1037 = vmatprep.subr.bf16.mxu0 %v995
        %1038 = vmatpush1.bf16.xpose.msra.mxu0 %v994
        %1039 = vmatprep.subr.bf16.mxu0 %v997
        %1040 = vmatpush1.bf16.xpose.msra.mxu0 %v996
        %1041 = vmatprep.subr.bf16.mxu0 %v999
        %1042 = vmatpush1.bf16.xpose.msra.mxu0 %v998
        %1043 = vmatprep.subr.bf16.mxu0 %v1001
        %1044 = vmatpush1.bf16.xpose.msra.mxu0 %v1000
        %1045 = vmatprep.subr.bf16.mxu0 %v1003
        %1046 = vmatpush1.bf16.xpose.msra.mxu0 %v1002
        %1047 = vmatprep.subr.bf16.mxu0 %v1005
        %1048 = vmatpush1.bf16.xpose.msra.mxu0 %v1004
        %1049 = vmatprep.subr.bf16.mxu0 %v1007
        %1050 = vmatpush1.bf16.xpose.msra.mxu0 %v1006
        %1051 = vmatprep.subr.bf16.mxu0 %v1009
        %1052 = vmatpush1.bf16.xpose.msra.mxu0 %v1008
        %1053 = vmatprep.subr.bf16.mxu0 %v1011
        %1054 = vmatpush1.bf16.xpose.msra.mxu0 %v1010
        %1055 = vmatprep.subr.bf16.mxu0 %v1013
        %1056 = vmatpush1.bf16.xpose.msra.mxu0 %v1012
        %1057 = vmatprep.subr.bf16.mxu0 %v1015
        %1058 = vmatpush1.bf16.xpose.msra.mxu0 %v1014
        %1059 = vmatprep.subr.bf16.mxu0 %v1017
        %1060 = vmatpush1.bf16.xpose.msra.mxu0 %v1016
        %1061 = vmatprep.subr.bf16.mxu0 %v1019
        %1062 = vmatpush1.bf16.xpose.msra.mxu0 %v1018
        %1063 = vmatprep.subr.bf16.mxu0 %v1021
        %1064 = vmatpush1.bf16.xpose.msra.mxu0 %v1020
        %1065 = vmatprep.subr.bf16.mxu0 %v1023
        %1066 = vmatpush1.bf16.xpose.msra.mxu0 %v1022
        %1067 = vmatprep.subr.bf16.mxu0 %v1025
        %1068 = vmatpush1.bf16.xpose.msra.mxu0 %v1024
        %1069 = vmatprep.mubr.bf16.mxu0 %v1034
        %1070 = vmatmul.mubr.bf16.gmra.mrb[0].mxu0 %v1033
        %v1071 = vpop.f32.mrb[0].mxu0
        %v1072 = vadd.f32 0.0, %v1071
        %v1073 = vpop.f32.mrb[0].mxu0
        %v1074 = vadd.f32 0.0, %v1073
        %v1075 = vpop.f32.mrb[0].mxu0
        %v1076 = vpop.f32.mrb[0].mxu0
        %1077 = vdwg.mxu0
        %1078 = vmatprep.subr.bf16.mxu0 %v995
        %1079 = vmatpush1.bf16.xpose.msra.mxu0 %v994
        %1080 = vmatprep.subr.bf16.mxu0 %v997
        %1081 = vmatpush1.bf16.xpose.msra.mxu0 %v996
        %1082 = vmatprep.subr.bf16.mxu0 %v999
        %1083 = vmatpush1.bf16.xpose.msra.mxu0 %v998
        %1084 = vmatprep.subr.bf16.mxu0 %v1001
        %1085 = vmatpush1.bf16.xpose.msra.mxu0 %v1000
        %1086 = vmatprep.subr.bf16.mxu0 %v1003
        %1087 = vmatpush1.bf16.xpose.msra.mxu0 %v1002
        %1088 = vmatprep.subr.bf16.mxu0 %v1005
        %1089 = vmatpush1.bf16.xpose.msra.mxu0 %v1004
        %1090 = vmatprep.subr.bf16.mxu0 %v1007
        %1091 = vmatpush1.bf16.xpose.msra.mxu0 %v1006
        %1092 = vmatprep.subr.bf16.mxu0 %v1009
        %1093 = vmatpush1.bf16.xpose.msra.mxu0 %v1008
        %1094 = vmatprep.subr.bf16.mxu0 %v1011
        %1095 = vmatpush1.bf16.xpose.msra.mxu0 %v1010
        %1096 = vmatprep.subr.bf16.mxu0 %v1013
        %1097 = vmatpush1.bf16.xpose.msra.mxu0 %v1012
        %1098 = vmatprep.subr.bf16.mxu0 %v1015
        %1099 = vmatpush1.bf16.xpose.msra.mxu0 %v1014
        %1100 = vmatprep.subr.bf16.mxu0 %v1017
        %1101 = vmatpush1.bf16.xpose.msra.mxu0 %v1016
        %1102 = vmatprep.subr.bf16.mxu0 %v1019
        %1103 = vmatpush1.bf16.xpose.msra.mxu0 %v1018
        %1104 = vmatprep.subr.bf16.mxu0 %v1021
        %1105 = vmatpush1.bf16.xpose.msra.mxu0 %v1020
        %1106 = vmatprep.subr.bf16.mxu0 %v1023
        %1107 = vmatpush1.bf16.xpose.msra.mxu0 %v1022
        %1108 = vmatprep.subr.bf16.mxu0 %v1025
        %1109 = vmatpush1.bf16.xpose.msra.mxu0 %v1024
        %1110 = vmatprep.mubr.bf16.mxu0 1065369472
        %1111 = vmatmul.mubr.bf16.gmra.mrb[0].mxu0 1065369472
        %v1112 = vpop.f32.mrb[0].mxu0
        %v1113 = vadd.f32 0.0, %v1112
        %v1114 = vpop.f32.mrb[0].mxu0
        %v1115 = vadd.f32 0.0, %v1114
        %v1116 = vpop.f32.mrb[0].mxu0
        %v1117 = vpop.f32.mrb[0].mxu0
        %1118 = vdwg.mxu0
        %s1119 = sld [smem:[#allocation2]]
        %v1120 = vrcp.pop %v1113
        %v1121 = vrcp.pop %v1115
        %v1122 = vstv %s1119
        %v1123 = vmul.f32 %v1122, %v1120
        %v1124 = vmul.f32 %v1122, %v1121
        %v1125 = vlaneseq
        %v1126 = vshrl.u32 %v1125, 7
        %v1127 = vsub.s32 0, %v1126
        %v1128 = vrot.slane %v1123, %v1127
        %v1129 = vlaneseq
        %v1130 = vshrl.u32 %v1129, 7
        %v1131 = vsub.s32 0, %v1130
        %v1132 = vrot.slane %v1124, %v1131
        %v1133 = vmul.f32 %v1072, %v1128
        %v1134 = vmul.f32 %v1074, %v1132
        %v1136 = vcombine.high %v367, %v367
        %v1138 = vadd.f32 %v1133, %v367
        %v1139 = vadd.f32 %v1134, %v1136
        %v1142 = vcombine.low %v1138, %v1139
        %1144 = vst [vmem:[%s299] sm:$0xff] %v1142
        %s1145 = sand.u32 %s171, 1
        %s1146 = scalar_lea.sflag [#allocation4], %s1145
        %s1147 = sand.u32 %s171, 1
        %s1148 = smul.addr %s1147, 8
        %s1149 = scalar_lea.vmem [#allocation3], %s1148
        // Predicated region
        $region41: #{tpu_custom_call.1} parent=39 // pred_check
          %p1150 = pneg %p181
        $region42: #{tpu_custom_call.1} parent=39 // pred_check_branch
          %1152 = sbr.rel (%p1150) target = $region44
        $region43: #{tpu_custom_call.1} parent=39 // pred_region
          %s1153 = smul.u32 2, %s25
          %s1155 = ssub.s32 128, 128
          %1156 = vsyncadd %s1146, %s1155
          %s1157 = smul.addr %s24, 2
          %s1158 = sadd.s32 %s1153, %s1157
          %s1159 = smul.addr %s1158, 64
          %s1160 = scalar_lea.hbm %s5, %s1159
          %s1162 = sshll.u32 %s1149, 4
          %s1163 = int_to_ptr.vmem [resolvable:$true] %s1162
          %1165 = dma.vmem_to_hbm [thread:$0]  %s1163, 128, %s1160, %s1146
        $region44: #{tpu_custom_call.1} parent=39 // pred_fallthru
          _
      $region40: #{tpu_custom_call.1} parent=5 // pred_fallthru
        _
      %p1166 = scmp.le.s32.totalorder 2, %s15
      // Predicated region
      $region45: #{tpu_custom_call.1} parent=5 // pred_check
        %p1167 = pneg %p1166
      $region46: #{tpu_custom_call.1} parent=5 // pred_check_branch
        %1169 = sbr.rel (%p1167) target = $region48
      $region47: #{tpu_custom_call.1} parent=5 // pred_region
        %s1170 = ssub.s32 %s15, 2
        // Predicated region
        $region49: #{tpu_custom_call.1} parent=47 // pred_check
          %p1171 = pneg %p187
        $region50: #{tpu_custom_call.1} parent=47 // pred_check_branch
          %1173 = sbr.rel (%p1171) target = $region52
        $region51: #{tpu_custom_call.1} parent=47 // pred_region
          %s1174 = sand.u32 %s172, 1
          %s1175 = scalar_lea.sflag [#allocation4], %s1174
          %s1176 = sand.u32 %s172, 1
          %s1177 = smul.addr %s1176, 8
          %s1178 = scalar_lea.vmem [#allocation3], %s1177
          %1179 = dma.done %s1175, 128
        $region52: #{tpu_custom_call.1} parent=47 // pred_fallthru
          _
      $region48: #{tpu_custom_call.1} parent=5 // pred_fallthru
        _
    $region6: #{tpu_custom_call.1} parent=1 // loop_footer
      %s19 = sadd.s32 1, %s15
    $region7: #{tpu_custom_call.1} parent=1 // loop_footer_branch
      %14 = sbr.rel target = $region3
    $region8: #{tpu_custom_call.1} parent=1 // loop_exit
      _
    %1180 = vsyncpa [#allocation4], 1
    %s1181 = scalar_lea.sflag [#allocation4], 1
    %1182 = vsyncpa %s1181, 1

</llo_original>
